<compile_context>
chip_gen: v7x
topology: tpu7x:2x2x1
jax: 0.10.0
libtpu: 0.0.40
codegen_flags: <defaults>
</compile_context>

<pallas_src>
import jax
import jax.numpy as jnp
from jax.experimental import pallas as pl
from jax.experimental.pallas import tpu as pltpu

_COUT_SPLITS = 2  # balanced 2-way Cout split so v7x's 2 TensorCores each get one tile


def conv1x1_kernel(xp_ref, w_ref, o_ref):
    # xp_ref: (Cin, Ho*Wo) bf16 -- 2x2-average-pooled activations of one image
    # w_ref : (tco, Cin)   f32  -- one Cout-slice of the 1x1 conv weight
    # o_ref : (tco, Ho*Wo) f32
    # 1x1 conv == channel matmul on the MXU (bf16 operands, f32 accumulation).
    o_ref[...] = jnp.dot(w_ref[...].astype(jnp.bfloat16), xp_ref[...],
                         preferred_element_type=jnp.float32)


@jax.jit
def conv1x1_avgpool(x_nchw, weight_oihw):
    """x_nchw: (N, Cin, H, W) f32; weight_oihw: (Cout, Cin, 1, 1) f32.
    Returns (N, Cout, H//2, W//2) f32 == AvgPool2d(2,2)(Conv2d 1x1 (no bias)(x))."""
    N, Cin, H, W = x_nchw.shape
    Cout = weight_oihw.shape[0]
    Ho, Wo = H // 2, W // 2
    L = Ho * Wo

    # AvgPool2d(2,2) commutes with a 1x1 conv -> pool the input first (4x fewer
    # MXU FLOPs and 4x less activation DMA into the kernel). One fused XLA pass:
    # f32 window mean, then a single cast to bf16. AvgPool2d silently drops a
    # trailing odd row/col, so slice to the even extent first (no-op for 28x28).
    xs = x_nchw[:, :, :Ho * 2, :Wo * 2]
    xp = xs.reshape(N, Cin, Ho, 2, Wo, 2).mean(axis=(3, 5))        # (N,Cin,Ho,Wo) f32
    xp = xp.reshape(N, Cin, L).astype(jnp.bfloat16)                 # free view + cast

    w2 = weight_oihw.reshape(Cout, Cin)                             # free view (1x1 kernel)

    n_co = _COUT_SPLITS if Cout % (8 * _COUT_SPLITS) == 0 else 1
    tco = Cout // n_co

    out = pl.pallas_call(
        conv1x1_kernel,
        out_shape=jax.ShapeDtypeStruct((N, Cout, L), jnp.float32),
        grid_spec=pltpu.PrefetchScalarGridSpec(
            num_scalar_prefetch=0,
            grid=(N, n_co),
            in_specs=[
                # pooled activations of image n (constant across the Cout axis)
                pl.BlockSpec((None, Cin, L), lambda n, c: (n, 0, 0)),
                # one Cout-slice of the weight (constant across the batch axis)
                pl.BlockSpec((tco, Cin), lambda n, c: (c, 0)),
            ],
            out_specs=pl.BlockSpec((None, tco, L), lambda n, c: (n, c, 0)),
        ),
        compiler_params=pltpu.CompilerParams(
            dimension_semantics=("parallel", "parallel"),   # megacore sharding on v7x
        ),
    )(xp, w2)

    # (N, Cout, Ho*Wo) -> NCHW, a free reshape (no transpose pass needed).
    return out.reshape(N, Cout, Ho, Wo)


if __name__ == "__main__":
    key = jax.random.PRNGKey(0)
    k_x, k_w = jax.random.split(key)

    # Shapes implied by the module: input (1, 768, 28, 28), conv weight (384, 768, 1, 1)
    N, Cin, H, W = 1, 768, 28, 28
    Cout = 384

    x = jax.random.normal(k_x, (N, Cin, H, W), dtype=jnp.float32)
    # deterministic "kaiming-ish" init for the 1x1 conv weight (module has no bias)
    weight = jax.random.normal(k_w, (Cout, Cin, 1, 1), dtype=jnp.float32) * (1.0 / jnp.sqrt(Cin))

    out = conv1x1_avgpool(x, weight)
    out = jax.block_until_ready(out)
    assert out.shape == (N, Cout, H // 2, W // 2), out.shape

    # Reference in plain f32 JAX: 1x1 conv as einsum, then 2x2 mean pool.
    y_ref = jnp.einsum("nchw,oc->nohw", x, weight.reshape(Cout, Cin))
    ref = y_ref.reshape(N, Cout, H // 2, 2, W // 2, 2).mean(axis=(3, 5))
    max_err = float(jnp.max(jnp.abs(out - ref)))
    # bf16 matmul operands (f32 accumulation, f32 pooling) => loose-ish tolerance
    assert jnp.allclose(out, ref, atol=3e-2, rtol=3e-2), max_err

    print("KERNEL_OK")
</pallas_src>

<mosaic_0001>
module attributes {stable_mosaic.version = 11 : i64} {
  func.func @conv1x1_kernel(%arg0: i32, %arg1: i32, %arg2: memref<1x768x196xbf16, #tpu.memory_space<vmem>>, %arg3: memref<192x768xf32, #tpu.memory_space<vmem>>, %arg4: memref<1x192x196xf32, #tpu.memory_space<vmem>>) attributes {dimension_semantics = [#tpu.dimension_semantics<parallel>, #tpu.dimension_semantics<parallel>], iteration_bounds = array<i64: 1, 2>, scalar_prefetch = 0 : i64, scratch_operands = 0 : i64, tpu.core_type = #tpu.core_type<tc>, window_params = [{transform_indices = @transform_0, window_bounds = array<i64: 1, 768, 196>}, {transform_indices = @transform_1, window_bounds = array<i64: 192, 768>}, {transform_indices = @transform_2, window_bounds = array<i64: 1, 192, 196>}]} {
    %c0 = arith.constant 0 : index
    %c0_0 = arith.constant 0 : index
    %0 = vector.load %arg3[%c0, %c0_0] : memref<192x768xf32, #tpu.memory_space<vmem>>, vector<192x768xf32>
    %1 = arith.truncf %0 : vector<192x768xf32> to vector<192x768xbf16>
    %c0_1 = arith.constant 0 : index
    %c0_2 = arith.constant 0 : index
    %c0_3 = arith.constant 0 : index
    %2 = vector.load %arg2[%c0_1, %c0_2, %c0_3] : memref<1x768x196xbf16, #tpu.memory_space<vmem>>, vector<1x768x196xbf16>
    %3 = vector.shape_cast %2 : vector<1x768x196xbf16> to vector<768x196xbf16>
    %cst = arith.constant dense<0.000000e+00> : vector<192x196xf32>
    %4 = tpu.matmul %1, %3, %cst {dimension_numbers = #tpu.dot_dimension_numbers<[1], [0], [0], [1], [0, 0, 1, 1], [], []>} : vector<192x768xbf16>, vector<768x196xbf16>, vector<192x196xf32> -> vector<192x196xf32>
    %c0_4 = arith.constant 0 : index
    %c0_5 = arith.constant 0 : index
    %c0_6 = arith.constant 0 : index
    %5 = vector.load %arg4[%c0_4, %c0_5, %c0_6] : memref<1x192x196xf32, #tpu.memory_space<vmem>>, vector<1x192x196xf32>
    %6 = vector.shape_cast %5 : vector<1x192x196xf32> to vector<192x196xf32>
    %7 = vector.shape_cast %4 : vector<192x196xf32> to vector<1x192x196xf32>
    tpu.vector_store %arg4[%c0_4, %c0_5, %c0_6], %7 {strides = array<i32>} : memref<1x192x196xf32, #tpu.memory_space<vmem>>, vector<1x192x196xf32>,
    return
  }
  func.func @transform_0(%arg0: i32, %arg1: i32) -> (i32, i32, i32) {
    %c0_i32 = arith.constant 0 : i32
    %c0_i32_0 = arith.constant 0 : i32
    %c0_i32_1 = arith.constant 0 : i32
    return %arg0, %c0_i32, %c0_i32_0 : i32, i32, i32
  }
  func.func @transform_1(%arg0: i32, %arg1: i32) -> (i32, i32) {
    %c0_i32 = arith.constant 0 : i32
    %c0_i32_0 = arith.constant 0 : i32
    return %arg1, %c0_i32 : i32, i32
  }
  func.func @transform_2(%arg0: i32, %arg1: i32) -> (i32, i32, i32) {
    %c0_i32 = arith.constant 0 : i32
    %c0_i32_0 = arith.constant 0 : i32
    return %arg0, %arg1, %c0_i32 : i32, i32, i32
  }
}

</mosaic_0001>

<llo_original>
// kernel: conv1x1_avgpool.1
$region0: #{conv1x1_avgpool.1}
  #allocation0 [shape = 'u32[]', space=smem, size = 0x4, offset = 0x4, fixed_abs, tag = 'smem constant byte address 0x4 - core index']
  #allocation1 [shape = 'u32[144,128]{1,0:T(1,128)}', space=vmem, size = 0x12000, scoped, tag = 'internal scratch']
  %s0 = inlined_call_operand.vmem [shape: bf16[1,768,196], index: 0, kind: input, shape index: {}]
  %s1 = inlined_call_operand.vmem [shape: f32[384,768], index: 1, kind: input, shape index: {}]
  %s2 = inlined_call_operand.vmem [shape: f32[1,384,196], index: 2, kind: output, shape index: {}]
  %s3 = sld [smem:[#allocation0]]
  $region41: #{conv1x1_avgpool.1} parent=0
    _
  %s5 = ssub.s32 1, %s3
  %s6 = scalar_select 0, %s5, %s3
  loop: start=0, step=1, limit=4
  $region2: #{conv1x1_avgpool.1} parent=0 // loop_pre_header
    _
  $region3: #{conv1x1_avgpool.1} parent=0 // loop_header
    %s8 = sphi 0, %s12
    %p9 = scmp.ge.s32.totalorder %s8, 4
    %s15 = sphi 0, %s27
    %s16 = sphi 0, %s23
    %s17 = sphi 0, %s15
    %s18 = sphi 0, %s16
    %s19 = sphi 0, %s17
    %s20 = sphi 0, %s18
    %s30 = sphi 0, %s32
    %s33 = sphi 0, %s30
    %s34 = sphi 0, %s33
    %s50 = sphi 0, %s34
    %s56 = sphi 0, %s58
    %s59 = sphi 0, %s56
    %s60 = sphi 0, %s59
    %s76 = sphi 0, %s60
    %s84 = sphi 0, %s86
    %s87 = sphi 0, %s84
    %s88 = sphi 0, %s87
    %s104 = sphi 0, %s88
  $region4: #{conv1x1_avgpool.1} parent=0 // loop_header_branch
    %11 = sbr.rel (%p9) target = $region8
  $region5: #{conv1x1_avgpool.1} parent=0 // loop_body
    %s13 = ssub.s32 %s8, 1
    %s14 = ssub.s32 %s8, 2
    %s21 = sadd.s32 1, %s16
    %p22 = scmp.ge.s32.totalorder %s21, 2
    %s23 = scalar_select %p22, 0, %s21
    %s24 = sadd.s32 1, %s15
    %s25 = scalar_select %p22, %s24, %s15
    %p26 = scmp.ge.s32.totalorder %s25, 1
    %s27 = scalar_select %p26, 0, %s25
    %s28 = ssub.s32 %s15, %s27
    %p29 = scmp.eq.s32.totalorder %s28, 0
    %s31 = sadd.s32 %s30, 1
    %s32 = scalar_select %p29, %s30, %s31
    %p35 = pneg %p29
    %p36 = scmp.eq.s32.totalorder %s8, 1
    %p37 = por %p35, %p36
    %p38 = scmp.ne.s32.totalorder %s30, %s33
    %p39 = scmp.eq.s32.totalorder %s8, 0
    %p40 = por %p38, %p39
    %p41 = scmp.ne.s32.totalorder %s30, %s33
    %p42 = scmp.eq.s32.totalorder %s13, 1
    %p43 = por %p41, %p42
    %p44 = scmp.ne.s32.totalorder %s33, %s34
    %p45 = scmp.eq.s32.totalorder %s13, 0
    %p46 = por %p44, %p45
    %p47 = scmp.ne.s32.totalorder %s33, %s34
    %p48 = scmp.eq.s32.totalorder %s14, 1
    %p49 = por %p47, %p48
    %p51 = scmp.ne.s32.totalorder %s34, %s50
    %p52 = scmp.eq.s32.totalorder %s14, 0
    %p53 = por %p51, %p52
    %s54 = ssub.s32 %s16, %s23
    %p55 = scmp.eq.s32.totalorder %s54, 0
    %s57 = sadd.s32 %s56, 1
    %s58 = scalar_select %p55, %s56, %s57
    %p61 = pneg %p55
    %p62 = scmp.eq.s32.totalorder %s8, 1
    %p63 = por %p61, %p62
    %p64 = scmp.ne.s32.totalorder %s56, %s59
    %p65 = scmp.eq.s32.totalorder %s8, 0
    %p66 = por %p64, %p65
    %p67 = scmp.ne.s32.totalorder %s56, %s59
    %p68 = scmp.eq.s32.totalorder %s13, 1
    %p69 = por %p67, %p68
    %p70 = scmp.ne.s32.totalorder %s59, %s60
    %p71 = scmp.eq.s32.totalorder %s13, 0
    %p72 = por %p70, %p71
    %p73 = scmp.ne.s32.totalorder %s59, %s60
    %p74 = scmp.eq.s32.totalorder %s14, 1
    %p75 = por %p73, %p74
    %p77 = scmp.ne.s32.totalorder %s60, %s76
    %p78 = scmp.eq.s32.totalorder %s14, 0
    %p79 = por %p77, %p78
    %s80 = ssub.s32 %s15, %s27
    %s81 = ssub.s32 %s16, %s23
    %s82 = sor.u32 %s80, %s81
    %p83 = scmp.eq.s32.totalorder %s82, 0
    %s85 = sadd.s32 %s84, 1
    %s86 = scalar_select %p83, %s84, %s85
    %p89 = pneg %p83
    %p90 = scmp.eq.s32.totalorder %s8, 1
    %p91 = por %p89, %p90
    %p92 = scmp.ne.s32.totalorder %s84, %s87
    %p93 = scmp.eq.s32.totalorder %s8, 0
    %p94 = por %p92, %p93
    %p95 = scmp.ne.s32.totalorder %s84, %s87
    %p96 = scmp.eq.s32.totalorder %s13, 1
    %p97 = por %p95, %p96
    %p98 = scmp.ne.s32.totalorder %s87, %s88
    %p99 = scmp.eq.s32.totalorder %s13, 0
    %p100 = por %p98, %p99
    %p101 = scmp.ne.s32.totalorder %s87, %s88
    %p102 = scmp.eq.s32.totalorder %s14, 1
    %p103 = por %p101, %p102
    %p105 = scmp.ne.s32.totalorder %s88, %s104
    %p106 = scmp.eq.s32.totalorder %s14, 0
    %p107 = por %p105, %p106
    %p108 = scmp.le.s32.totalorder 1, %s8
    %p109 = scmp.lt.s32.totalorder %s8, 3
    %p110 = pnand %p108, %p109
    %p111 = pneg %p110
    // Predicated region
    $region9: #{conv1x1_avgpool.1} parent=5 // pred_check
      _
    $region10: #{conv1x1_avgpool.1} parent=5 // pred_check_branch
      %113 = sbr.rel (%p110) target = $region12
    $region11: #{conv1x1_avgpool.1} parent=5 // pred_region
      %s114 = ssub.s32 %s8, 1
      // Predicated region
      $region13: #{conv1x1_avgpool.1} parent=11 // pred_check
        %p115 = pneg %p46
      $region14: #{conv1x1_avgpool.1} parent=11 // pred_check_branch
        %117 = sbr.rel (%p115) target = $region16
      $region15: #{conv1x1_avgpool.1} parent=11 // pred_region
        %p118 = scmp.lt.s32.totalorder %s17, 0
        %s119 = scalar_select %p118, %s17, 0
        %s120 = smul.addr %s119, 192
        %s121 = smul.addr %s120, 4
        %s122 = scalar_lea.vmem %s0, %s121
      $region16: #{conv1x1_avgpool.1} parent=11 // pred_fallthru
        _
    $region12: #{conv1x1_avgpool.1} parent=5 // pred_fallthru
      _
    %p123 = scmp.lt.s32.totalorder %s8, 2
    // Predicated region
    $region17: #{conv1x1_avgpool.1} parent=5 // pred_check
      %p124 = pneg %p123
    $region18: #{conv1x1_avgpool.1} parent=5 // pred_check_branch
      %126 = sbr.rel (%p124) target = $region20
    $region19: #{conv1x1_avgpool.1} parent=5 // pred_region
      // Predicated region
      $region21: #{conv1x1_avgpool.1} parent=19 // pred_check
        %p127 = pneg %p66
      $region22: #{conv1x1_avgpool.1} parent=19 // pred_check_branch
        %129 = sbr.rel (%p127) target = $region24
      $region23: #{conv1x1_avgpool.1} parent=19 // pred_region
        %s130 = smul.u32 24, %s16
        %p131 = scmp.lt.s32.totalorder %s130, 47
        %s132 = scalar_select %p131, %s130, 47
        %s133 = smul.addr %s132, 6
        %s134 = smul.addr %s133, 8
        %s135 = scalar_lea.vmem %s1, %s134
        %s136 = smul.u32 24, %s16
      $region24: #{conv1x1_avgpool.1} parent=19 // pred_fallthru
        _
    $region20: #{conv1x1_avgpool.1} parent=5 // pred_fallthru
      _
    %p137 = scmp.le.s32.totalorder 1, %s8
    %p138 = scmp.lt.s32.totalorder %s8, 3
    %p139 = pnand %p137, %p138
    %p140 = pneg %p139
    // Predicated region
    $region25: #{conv1x1_avgpool.1} parent=5 // pred_check
      _
    $region26: #{conv1x1_avgpool.1} parent=5 // pred_check_branch
      %142 = sbr.rel (%p139) target = $region28
    $region27: #{conv1x1_avgpool.1} parent=5 // pred_region
      %s143 = ssub.s32 %s8, 1
      %p144 = scmp.lt.s32.totalorder %s17, 0
      %s145 = scalar_select %p144, %s17, 0
      %s146 = smul.addr %s145, 192
      %s147 = smul.addr %s146, 4
      %s148 = scalar_lea.vmem %s0, %s147
      %p149 = pneg %p46
      %p150 = pneg %p43
      %s151 = smul.u32 24, %s18
      %p152 = scmp.lt.s32.totalorder %s151, 47
      %s153 = scalar_select %p152, %s151, 47
      %s154 = smul.addr %s153, 6
      %s155 = smul.addr %s154, 8
      %s156 = scalar_lea.vmem %s1, %s155
      %p157 = pneg %p72
      %p158 = pneg %p69
      %p159 = pneg %p100
      %p160 = pneg %p97
      %s161 = smul.u32 24, %s18
      %p162 = scmp.lt.s32.totalorder %s17, 0
      %s163 = scalar_select %p162, %s17, 0
      %p164 = scmp.lt.s32.totalorder %s161, 47
      %s165 = scalar_select %p164, %s161, 47
      %s166 = smul.addr %s165, 2
      %s167 = smul.addr %s163, 96
      %s168 = sadd.s32 %s166, %s167
      %s169 = smul.addr %s168, 8
      %s170 = scalar_lea.vmem %s2, %s169
      %p171 = scmp.lt.s32.totalorder %s17, 0
      %s172 = scalar_select %p171, %s17, 0
      %s173 = smul.addr %s172, 192
      %s174 = smul.addr %s173, 4
      %s175 = scalar_lea.vmem %s0, %s174
      %s176 = smul.u32 24, %s18
      %p177 = scmp.lt.s32.totalorder %s176, 47
      %s178 = scalar_select %p177, %s176, 47
      %s179 = smul.addr %s178, 6
      %s180 = smul.addr %s179, 8
      %s181 = scalar_lea.vmem %s1, %s180
      %s182 = smul.u32 24, %s18
      %s183 = smul.u32 24, %s18
      %p184 = scmp.lt.s32.totalorder %s17, 0
      %s185 = scalar_select %p184, %s17, 0
      %p186 = scmp.lt.s32.totalorder %s183, 47
      %s187 = scalar_select %p186, %s183, 47
      %s188 = smul.addr %s187, 2
      %s189 = smul.addr %s185, 96
      %s190 = sadd.s32 %s188, %s189
      %s191 = smul.addr %s190, 8
      %s192 = scalar_lea.vmem %s2, %s191
      %s193 = smul.u32 24, %s18
      %v194 = vld [vmem:[%s181] sm:$0xff]
      %v195 = vld [vmem:[%s181 + $0x8] sm:$0xff]
      %v196 = vld [vmem:[%s181 + $0x10] sm:$0xff]
      %v197 = vld [vmem:[%s181 + $0x18] sm:$0xff]
      %v198 = vld [vmem:[%s181 + $0x20] sm:$0xff]
      %v199 = vld [vmem:[%s181 + $0x28] sm:$0xff]
      %v200 = vld [vmem:[%s181 + $0x30] sm:$0xff]
      %v201 = vld [vmem:[%s181 + $0x38] sm:$0xff]
      %v202 = vld [vmem:[%s181 + $0x40] sm:$0xff]
      %v203 = vld [vmem:[%s181 + $0x48] sm:$0xff]
      %v204 = vld [vmem:[%s181 + $0x50] sm:$0xff]
      %v205 = vld [vmem:[%s181 + $0x58] sm:$0xff]
      %v206 = vld [vmem:[%s181 + $0x60] sm:$0xff]
      %v207 = vld [vmem:[%s181 + $0x68] sm:$0xff]
      %v208 = vld [vmem:[%s181 + $0x70] sm:$0xff]
      %v209 = vld [vmem:[%s181 + $0x78] sm:$0xff]
      %v210 = vld [vmem:[%s181 + $0x80] sm:$0xff]
      %v211 = vld [vmem:[%s181 + $0x88] sm:$0xff]
      %v212 = vld [vmem:[%s181 + $0x90] sm:$0xff]
      %v213 = vld [vmem:[%s181 + $0x98] sm:$0xff]
      %v214 = vld [vmem:[%s181 + $0xa0] sm:$0xff]
      %v215 = vld [vmem:[%s181 + $0xa8] sm:$0xff]
      %v216 = vld [vmem:[%s181 + $0xb0] sm:$0xff]
      %v217 = vld [vmem:[%s181 + $0xb8] sm:$0xff]
      %v218 = vld [vmem:[%s181 + $0xc0] sm:$0xff]
      %v219 = vld [vmem:[%s181 + $0xc8] sm:$0xff]
      %v220 = vld [vmem:[%s181 + $0xd0] sm:$0xff]
      %v221 = vld [vmem:[%s181 + $0xd8] sm:$0xff]
      %v222 = vld [vmem:[%s181 + $0xe0] sm:$0xff]
      %v223 = vld [vmem:[%s181 + $0xe8] sm:$0xff]
      %v224 = vld [vmem:[%s181 + $0xf0] sm:$0xff]
      %v225 = vld [vmem:[%s181 + $0xf8] sm:$0xff]
      %v226 = vld [vmem:[%s181 + $0x100] sm:$0xff]
      %v227 = vld [vmem:[%s181 + $0x108] sm:$0xff]
      %v228 = vld [vmem:[%s181 + $0x110] sm:$0xff]
      %v229 = vld [vmem:[%s181 + $0x118] sm:$0xff]
      %v230 = vld [vmem:[%s181 + $0x120] sm:$0xff]
      %v231 = vld [vmem:[%s181 + $0x128] sm:$0xff]
      %v232 = vld [vmem:[%s181 + $0x130] sm:$0xff]
      %v233 = vld [vmem:[%s181 + $0x138] sm:$0xff]
      %v234 = vld [vmem:[%s181 + $0x140] sm:$0xff]
      %v235 = vld [vmem:[%s181 + $0x148] sm:$0xff]
      %v236 = vld [vmem:[%s181 + $0x150] sm:$0xff]
      %v237 = vld [vmem:[%s181 + $0x158] sm:$0xff]
      %v238 = vld [vmem:[%s181 + $0x160] sm:$0xff]
      %v239 = vld [vmem:[%s181 + $0x168] sm:$0xff]
      %v240 = vld [vmem:[%s181 + $0x170] sm:$0xff]
      %v241 = vld [vmem:[%s181 + $0x178] sm:$0xff]
      %v242 = vld [vmem:[%s181 + $0x180] sm:$0xff]
      %v243 = vld [vmem:[%s181 + $0x188] sm:$0xff]
      %v244 = vld [vmem:[%s181 + $0x190] sm:$0xff]
      %v245 = vld [vmem:[%s181 + $0x198] sm:$0xff]
      %v246 = vld [vmem:[%s181 + $0x1a0] sm:$0xff]
      %v247 = vld [vmem:[%s181 + $0x1a8] sm:$0xff]
      %v248 = vld [vmem:[%s181 + $0x1b0] sm:$0xff]
      %v249 = vld [vmem:[%s181 + $0x1b8] sm:$0xff]
      %v250 = vld [vmem:[%s181 + $0x1c0] sm:$0xff]
      %v251 = vld [vmem:[%s181 + $0x1c8] sm:$0xff]
      %v252 = vld [vmem:[%s181 + $0x1d0] sm:$0xff]
      %v253 = vld [vmem:[%s181 + $0x1d8] sm:$0xff]
      %v254 = vld [vmem:[%s181 + $0x1e0] sm:$0xff]
      %v255 = vld [vmem:[%s181 + $0x1e8] sm:$0xff]
      %v256 = vld [vmem:[%s181 + $0x1f0] sm:$0xff]
      %v257 = vld [vmem:[%s181 + $0x1f8] sm:$0xff]
      %v258 = vld [vmem:[%s181 + $0x200] sm:$0xff]
      %v259 = vld [vmem:[%s181 + $0x208] sm:$0xff]
      %v260 = vld [vmem:[%s181 + $0x210] sm:$0xff]
      %v261 = vld [vmem:[%s181 + $0x218] sm:$0xff]
      %v262 = vld [vmem:[%s181 + $0x220] sm:$0xff]
      %v263 = vld [vmem:[%s181 + $0x228] sm:$0xff]
      %v264 = vld [vmem:[%s181 + $0x230] sm:$0xff]
      %v265 = vld [vmem:[%s181 + $0x238] sm:$0xff]
      %v266 = vld [vmem:[%s181 + $0x240] sm:$0xff]
      %v267 = vld [vmem:[%s181 + $0x248] sm:$0xff]
      %v268 = vld [vmem:[%s181 + $0x250] sm:$0xff]
      %v269 = vld [vmem:[%s181 + $0x258] sm:$0xff]
      %v270 = vld [vmem:[%s181 + $0x260] sm:$0xff]
      %v271 = vld [vmem:[%s181 + $0x268] sm:$0xff]
      %v272 = vld [vmem:[%s181 + $0x270] sm:$0xff]
      %v273 = vld [vmem:[%s181 + $0x278] sm:$0xff]
      %v274 = vld [vmem:[%s181 + $0x280] sm:$0xff]
      %v275 = vld [vmem:[%s181 + $0x288] sm:$0xff]
      %v276 = vld [vmem:[%s181 + $0x290] sm:$0xff]
      %v277 = vld [vmem:[%s181 + $0x298] sm:$0xff]
      %v278 = vld [vmem:[%s181 + $0x2a0] sm:$0xff]
      %v279 = vld [vmem:[%s181 + $0x2a8] sm:$0xff]
      %v280 = vld [vmem:[%s181 + $0x2b0] sm:$0xff]
      %v281 = vld [vmem:[%s181 + $0x2b8] sm:$0xff]
      %v282 = vld [vmem:[%s181 + $0x2c0] sm:$0xff]
      %v283 = vld [vmem:[%s181 + $0x2c8] sm:$0xff]
      %v284 = vld [vmem:[%s181 + $0x2d0] sm:$0xff]
      %v285 = vld [vmem:[%s181 + $0x2d8] sm:$0xff]
      %v286 = vld [vmem:[%s181 + $0x2e0] sm:$0xff]
      %v287 = vld [vmem:[%s181 + $0x2e8] sm:$0xff]
      %v288 = vld [vmem:[%s181 + $0x2f0] sm:$0xff]
      %v289 = vld [vmem:[%s181 + $0x2f8] sm:$0xff]
      %v290 = vld [vmem:[%s181 + $0x300] sm:$0xff]
      %v291 = vld [vmem:[%s181 + $0x308] sm:$0xff]
      %v292 = vld [vmem:[%s181 + $0x310] sm:$0xff]
      %v293 = vld [vmem:[%s181 + $0x318] sm:$0xff]
      %v294 = vld [vmem:[%s181 + $0x320] sm:$0xff]
      %v295 = vld [vmem:[%s181 + $0x328] sm:$0xff]
      %v296 = vld [vmem:[%s181 + $0x330] sm:$0xff]
      %v297 = vld [vmem:[%s181 + $0x338] sm:$0xff]
      %v298 = vld [vmem:[%s181 + $0x340] sm:$0xff]
      %v299 = vld [vmem:[%s181 + $0x348] sm:$0xff]
      %v300 = vld [vmem:[%s181 + $0x350] sm:$0xff]
      %v301 = vld [vmem:[%s181 + $0x358] sm:$0xff]
      %v302 = vld [vmem:[%s181 + $0x360] sm:$0xff]
      %v303 = vld [vmem:[%s181 + $0x368] sm:$0xff]
      %v304 = vld [vmem:[%s181 + $0x370] sm:$0xff]
      %v305 = vld [vmem:[%s181 + $0x378] sm:$0xff]
      %v306 = vld [vmem:[%s181 + $0x380] sm:$0xff]
      %v307 = vld [vmem:[%s181 + $0x388] sm:$0xff]
      %v308 = vld [vmem:[%s181 + $0x390] sm:$0xff]
      %v309 = vld [vmem:[%s181 + $0x398] sm:$0xff]
      %v310 = vld [vmem:[%s181 + $0x3a0] sm:$0xff]
      %v311 = vld [vmem:[%s181 + $0x3a8] sm:$0xff]
      %v312 = vld [vmem:[%s181 + $0x3b0] sm:$0xff]
      %v313 = vld [vmem:[%s181 + $0x3b8] sm:$0xff]
      %v314 = vld [vmem:[%s181 + $0x3c0] sm:$0xff]
      %v315 = vld [vmem:[%s181 + $0x3c8] sm:$0xff]
      %v316 = vld [vmem:[%s181 + $0x3d0] sm:$0xff]
      %v317 = vld [vmem:[%s181 + $0x3d8] sm:$0xff]
      %v318 = vld [vmem:[%s181 + $0x3e0] sm:$0xff]
      %v319 = vld [vmem:[%s181 + $0x3e8] sm:$0xff]
      %v320 = vld [vmem:[%s181 + $0x3f0] sm:$0xff]
      %v321 = vld [vmem:[%s181 + $0x3f8] sm:$0xff]
      %v322 = vld [vmem:[%s181 + $0x400] sm:$0xff]
      %v323 = vld [vmem:[%s181 + $0x408] sm:$0xff]
      %v324 = vld [vmem:[%s181 + $0x410] sm:$0xff]
      %v325 = vld [vmem:[%s181 + $0x418] sm:$0xff]
      %v326 = vld [vmem:[%s181 + $0x420] sm:$0xff]
      %v327 = vld [vmem:[%s181 + $0x428] sm:$0xff]
      %v328 = vld [vmem:[%s181 + $0x430] sm:$0xff]
      %v329 = vld [vmem:[%s181 + $0x438] sm:$0xff]
      %v330 = vld [vmem:[%s181 + $0x440] sm:$0xff]
      %v331 = vld [vmem:[%s181 + $0x448] sm:$0xff]
      %v332 = vld [vmem:[%s181 + $0x450] sm:$0xff]
      %v333 = vld [vmem:[%s181 + $0x458] sm:$0xff]
      %v334 = vld [vmem:[%s181 + $0x460] sm:$0xff]
      %v335 = vld [vmem:[%s181 + $0x468] sm:$0xff]
      %v336 = vld [vmem:[%s181 + $0x470] sm:$0xff]
      %v337 = vld [vmem:[%s181 + $0x478] sm:$0xff]
      %v338 = vpack.c.bf16 %v200, %v194
      %v339 = vpack.c.bf16 %v201, %v195
      %v340 = vpack.c.bf16 %v202, %v196
      %v341 = vpack.c.bf16 %v203, %v197
      %v342 = vpack.c.bf16 %v204, %v198
      %v343 = vpack.c.bf16 %v205, %v199
      %v344 = vpack.c.bf16 %v212, %v206
      %v345 = vpack.c.bf16 %v213, %v207
      %v346 = vpack.c.bf16 %v214, %v208
      %v347 = vpack.c.bf16 %v215, %v209
      %v348 = vpack.c.bf16 %v216, %v210
      %v349 = vpack.c.bf16 %v217, %v211
      %v350 = vpack.c.bf16 %v224, %v218
      %v351 = vpack.c.bf16 %v225, %v219
      %v352 = vpack.c.bf16 %v226, %v220
      %v353 = vpack.c.bf16 %v227, %v221
      %v354 = vpack.c.bf16 %v228, %v222
      %v355 = vpack.c.bf16 %v229, %v223
      %v356 = vpack.c.bf16 %v236, %v230
      %v357 = vpack.c.bf16 %v237, %v231
      %v358 = vpack.c.bf16 %v238, %v232
      %v359 = vpack.c.bf16 %v239, %v233
      %v360 = vpack.c.bf16 %v240, %v234
      %v361 = vpack.c.bf16 %v241, %v235
      %v362 = vpack.c.bf16 %v248, %v242
      %v363 = vpack.c.bf16 %v249, %v243
      %v364 = vpack.c.bf16 %v250, %v244
      %v365 = vpack.c.bf16 %v251, %v245
      %v366 = vpack.c.bf16 %v252, %v246
      %v367 = vpack.c.bf16 %v253, %v247
      %v368 = vpack.c.bf16 %v260, %v254
      %v369 = vpack.c.bf16 %v261, %v255
      %v370 = vpack.c.bf16 %v262, %v256
      %v371 = vpack.c.bf16 %v263, %v257
      %v372 = vpack.c.bf16 %v264, %v258
      %v373 = vpack.c.bf16 %v265, %v259
      %v374 = vpack.c.bf16 %v272, %v266
      %v375 = vpack.c.bf16 %v273, %v267
      %v376 = vpack.c.bf16 %v274, %v268
      %v377 = vpack.c.bf16 %v275, %v269
      %v378 = vpack.c.bf16 %v276, %v270
      %v379 = vpack.c.bf16 %v277, %v271
      %v380 = vpack.c.bf16 %v284, %v278
      %v381 = vpack.c.bf16 %v285, %v279
      %v382 = vpack.c.bf16 %v286, %v280
      %v383 = vpack.c.bf16 %v287, %v281
      %v384 = vpack.c.bf16 %v288, %v282
      %v385 = vpack.c.bf16 %v289, %v283
      %v386 = vpack.c.bf16 %v296, %v290
      %v387 = vpack.c.bf16 %v297, %v291
      %v388 = vpack.c.bf16 %v298, %v292
      %v389 = vpack.c.bf16 %v299, %v293
      %v390 = vpack.c.bf16 %v300, %v294
      %v391 = vpack.c.bf16 %v301, %v295
      %v392 = vpack.c.bf16 %v308, %v302
      %v393 = vpack.c.bf16 %v309, %v303
      %v394 = vpack.c.bf16 %v310, %v304
      %v395 = vpack.c.bf16 %v311, %v305
      %v396 = vpack.c.bf16 %v312, %v306
      %v397 = vpack.c.bf16 %v313, %v307
      %v398 = vpack.c.bf16 %v320, %v314
      %v399 = vpack.c.bf16 %v321, %v315
      %v400 = vpack.c.bf16 %v322, %v316
      %v401 = vpack.c.bf16 %v323, %v317
      %v402 = vpack.c.bf16 %v324, %v318
      %v403 = vpack.c.bf16 %v325, %v319
      %v404 = vpack.c.bf16 %v332, %v326
      %v405 = vpack.c.bf16 %v333, %v327
      %v406 = vpack.c.bf16 %v334, %v328
      %v407 = vpack.c.bf16 %v335, %v329
      %v408 = vpack.c.bf16 %v336, %v330
      %v409 = vpack.c.bf16 %v337, %v331
      %v410 = vld [vmem:[%s175] sm:$0xff]
      %v411 = vld [vmem:[%s175 + $0x8] sm:$0xff]
      %v412 = vld [vmem:[%s175 + $0x10] sm:$0xff]
      %v413 = vld [vmem:[%s175 + $0x18] sm:$0xff]
      %v414 = vld [vmem:[%s175 + $0x20] sm:$0xff]
      %v415 = vld [vmem:[%s175 + $0x28] sm:$0xff]
      %v416 = vld [vmem:[%s175 + $0x30] sm:$0xff]
      %v417 = vld [vmem:[%s175 + $0x38] sm:$0xff]
      %v418 = vld [vmem:[%s175 + $0x40] sm:$0xff]
      %v419 = vld [vmem:[%s175 + $0x48] sm:$0xff]
      %v420 = vld [vmem:[%s175 + $0x50] sm:$0xff]
      %v421 = vld [vmem:[%s175 + $0x58] sm:$0xff]
      %v422 = vld [vmem:[%s175 + $0x60] sm:$0xff]
      %v423 = vld [vmem:[%s175 + $0x68] sm:$0xff]
      %v424 = vld [vmem:[%s175 + $0x70] sm:$0xff]
      %v425 = vld [vmem:[%s175 + $0x78] sm:$0xff]
      %v426 = vld [vmem:[%s175 + $0x80] sm:$0xff]
      %v427 = vld [vmem:[%s175 + $0x88] sm:$0xff]
      %v428 = vld [vmem:[%s175 + $0x90] sm:$0xff]
      %v429 = vld [vmem:[%s175 + $0x98] sm:$0xff]
      %v430 = vld [vmem:[%s175 + $0xa0] sm:$0xff]
      %v431 = vld [vmem:[%s175 + $0xa8] sm:$0xff]
      %v432 = vld [vmem:[%s175 + $0xb0] sm:$0xff]
      %v433 = vld [vmem:[%s175 + $0xb8] sm:$0xff]
      %v434 = vld [vmem:[%s175 + $0xc0] sm:$0xff]
      %v435 = vld [vmem:[%s175 + $0xc8] sm:$0xff]
      %v436 = vld [vmem:[%s175 + $0xd0] sm:$0xff]
      %v437 = vld [vmem:[%s175 + $0xd8] sm:$0xff]
      %v438 = vld [vmem:[%s175 + $0xe0] sm:$0xff]
      %v439 = vld [vmem:[%s175 + $0xe8] sm:$0xff]
      %v440 = vld [vmem:[%s175 + $0xf0] sm:$0xff]
      %v441 = vld [vmem:[%s175 + $0xf8] sm:$0xff]
      %v442 = vld [vmem:[%s175 + $0x100] sm:$0xff]
      %v443 = vld [vmem:[%s175 + $0x108] sm:$0xff]
      %v444 = vld [vmem:[%s175 + $0x110] sm:$0xff]
      %v445 = vld [vmem:[%s175 + $0x118] sm:$0xff]
      %v446 = vld [vmem:[%s175 + $0x120] sm:$0xff]
      %v447 = vld [vmem:[%s175 + $0x128] sm:$0xff]
      %v448 = vld [vmem:[%s175 + $0x130] sm:$0xff]
      %v449 = vld [vmem:[%s175 + $0x138] sm:$0xff]
      %v450 = vld [vmem:[%s175 + $0x140] sm:$0xff]
      %v451 = vld [vmem:[%s175 + $0x148] sm:$0xff]
      %v452 = vld [vmem:[%s175 + $0x150] sm:$0xff]
      %v453 = vld [vmem:[%s175 + $0x158] sm:$0xff]
      %v454 = vld [vmem:[%s175 + $0x160] sm:$0xff]
      %v455 = vld [vmem:[%s175 + $0x168] sm:$0xff]
      %v456 = vld [vmem:[%s175 + $0x170] sm:$0xff]
      %v457 = vld [vmem:[%s175 + $0x178] sm:$0xff]
      %v458 = vld [vmem:[%s175 + $0x180] sm:$0xff]
      %v459 = vld [vmem:[%s175 + $0x188] sm:$0xff]
      %v460 = vld [vmem:[%s175 + $0x190] sm:$0xff]
      %v461 = vld [vmem:[%s175 + $0x198] sm:$0xff]
      %v462 = vld [vmem:[%s175 + $0x1a0] sm:$0xff]
      %v463 = vld [vmem:[%s175 + $0x1a8] sm:$0xff]
      %v464 = vld [vmem:[%s175 + $0x1b0] sm:$0xff]
      %v465 = vld [vmem:[%s175 + $0x1b8] sm:$0xff]
      %v466 = vld [vmem:[%s175 + $0x1c0] sm:$0xff]
      %v467 = vld [vmem:[%s175 + $0x1c8] sm:$0xff]
      %v468 = vld [vmem:[%s175 + $0x1d0] sm:$0xff]
      %v469 = vld [vmem:[%s175 + $0x1d8] sm:$0xff]
      %v470 = vld [vmem:[%s175 + $0x1e0] sm:$0xff]
      %v471 = vld [vmem:[%s175 + $0x1e8] sm:$0xff]
      %v472 = vld [vmem:[%s175 + $0x1f0] sm:$0xff]
      %v473 = vld [vmem:[%s175 + $0x1f8] sm:$0xff]
      %v474 = vld [vmem:[%s175 + $0x200] sm:$0xff]
      %v475 = vld [vmem:[%s175 + $0x208] sm:$0xff]
      %v476 = vld [vmem:[%s175 + $0x210] sm:$0xff]
      %v477 = vld [vmem:[%s175 + $0x218] sm:$0xff]
      %v478 = vld [vmem:[%s175 + $0x220] sm:$0xff]
      %v479 = vld [vmem:[%s175 + $0x228] sm:$0xff]
      %v480 = vld [vmem:[%s175 + $0x230] sm:$0xff]
      %v481 = vld [vmem:[%s175 + $0x238] sm:$0xff]
      %v482 = vld [vmem:[%s175 + $0x240] sm:$0xff]
      %v483 = vld [vmem:[%s175 + $0x248] sm:$0xff]
      %v484 = vld [vmem:[%s175 + $0x250] sm:$0xff]
      %v485 = vld [vmem:[%s175 + $0x258] sm:$0xff]
      %v486 = vld [vmem:[%s175 + $0x260] sm:$0xff]
      %v487 = vld [vmem:[%s175 + $0x268] sm:$0xff]
      %v488 = vld [vmem:[%s175 + $0x270] sm:$0xff]
      %v489 = vld [vmem:[%s175 + $0x278] sm:$0xff]
      %v490 = vld [vmem:[%s175 + $0x280] sm:$0xff]
      %v491 = vld [vmem:[%s175 + $0x288] sm:$0xff]
      %v492 = vld [vmem:[%s175 + $0x290] sm:$0xff]
      %v493 = vld [vmem:[%s175 + $0x298] sm:$0xff]
      %v494 = vld [vmem:[%s175 + $0x2a0] sm:$0xff]
      %v495 = vld [vmem:[%s175 + $0x2a8] sm:$0xff]
      %v496 = vld [vmem:[%s175 + $0x2b0] sm:$0xff]
      %v497 = vld [vmem:[%s175 + $0x2b8] sm:$0xff]
      %v498 = vld [vmem:[%s175 + $0x2c0] sm:$0xff]
      %v499 = vld [vmem:[%s175 + $0x2c8] sm:$0xff]
      %v500 = vld [vmem:[%s175 + $0x2d0] sm:$0xff]
      %v501 = vld [vmem:[%s175 + $0x2d8] sm:$0xff]
      %v502 = vld [vmem:[%s175 + $0x2e0] sm:$0xff]
      %v503 = vld [vmem:[%s175 + $0x2e8] sm:$0xff]
      %v504 = vld [vmem:[%s175 + $0x2f0] sm:$0xff]
      %v505 = vld [vmem:[%s175 + $0x2f8] sm:$0xff]
      %v602 = vunpack.c.l.b16 %v410
      %v603 = vunpack.c.h.b16 %v410
      %v604 = vunpack.c.l.b16 %v411
      %v605 = vunpack.c.h.b16 %v411
      %v606 = vunpack.c.l.b16 %v412
      %v607 = vunpack.c.h.b16 %v412
      %v608 = vunpack.c.l.b16 %v413
      %v609 = vunpack.c.h.b16 %v413
      %v610 = vunpack.c.l.b16 %v414
      %v611 = vunpack.c.h.b16 %v414
      %v612 = vunpack.c.l.b16 %v415
      %v613 = vunpack.c.h.b16 %v415
      %v614 = vunpack.c.l.b16 %v416
      %v615 = vunpack.c.h.b16 %v416
      %v616 = vunpack.c.l.b16 %v417
      %v617 = vunpack.c.h.b16 %v417
      %v618 = vunpack.c.l.b16 %v418
      %v619 = vunpack.c.h.b16 %v418
      %v620 = vunpack.c.l.b16 %v419
      %v621 = vunpack.c.h.b16 %v419
      %v622 = vunpack.c.l.b16 %v420
      %v623 = vunpack.c.h.b16 %v420
      %v624 = vunpack.c.l.b16 %v421
      %v625 = vunpack.c.h.b16 %v421
      %v626 = vunpack.c.l.b16 %v422
      %v627 = vunpack.c.h.b16 %v422
      %v628 = vunpack.c.l.b16 %v423
      %v629 = vunpack.c.h.b16 %v423
      %v630 = vunpack.c.l.b16 %v424
      %v631 = vunpack.c.h.b16 %v424
      %v632 = vunpack.c.l.b16 %v425
      %v633 = vunpack.c.h.b16 %v425
      %v634 = vunpack.c.l.b16 %v426
      %v635 = vunpack.c.h.b16 %v426
      %v636 = vunpack.c.l.b16 %v427
      %v637 = vunpack.c.h.b16 %v427
      %v638 = vunpack.c.l.b16 %v428
      %v639 = vunpack.c.h.b16 %v428
      %v640 = vunpack.c.l.b16 %v429
      %v641 = vunpack.c.h.b16 %v429
      %v642 = vunpack.c.l.b16 %v430
      %v643 = vunpack.c.h.b16 %v430
      %v644 = vunpack.c.l.b16 %v431
      %v645 = vunpack.c.h.b16 %v431
      %v646 = vunpack.c.l.b16 %v432
      %v647 = vunpack.c.h.b16 %v432
      %v648 = vunpack.c.l.b16 %v433
      %v649 = vunpack.c.h.b16 %v433
      %v650 = vunpack.c.l.b16 %v434
      %v651 = vunpack.c.h.b16 %v434
      %v652 = vunpack.c.l.b16 %v435
      %v653 = vunpack.c.h.b16 %v435
      %v654 = vunpack.c.l.b16 %v436
      %v655 = vunpack.c.h.b16 %v436
      %v656 = vunpack.c.l.b16 %v437
      %v657 = vunpack.c.h.b16 %v437
      %v658 = vunpack.c.l.b16 %v438
      %v659 = vunpack.c.h.b16 %v438
      %v660 = vunpack.c.l.b16 %v439
      %v661 = vunpack.c.h.b16 %v439
      %v662 = vunpack.c.l.b16 %v440
      %v663 = vunpack.c.h.b16 %v440
      %v664 = vunpack.c.l.b16 %v441
      %v665 = vunpack.c.h.b16 %v441
      %v666 = vunpack.c.l.b16 %v442
      %v667 = vunpack.c.h.b16 %v442
      %v668 = vunpack.c.l.b16 %v443
      %v669 = vunpack.c.h.b16 %v443
      %v670 = vunpack.c.l.b16 %v444
      %v671 = vunpack.c.h.b16 %v444
      %v672 = vunpack.c.l.b16 %v445
      %v673 = vunpack.c.h.b16 %v445
      %v674 = vunpack.c.l.b16 %v446
      %v675 = vunpack.c.h.b16 %v446
      %v676 = vunpack.c.l.b16 %v447
      %v677 = vunpack.c.h.b16 %v447
      %v678 = vunpack.c.l.b16 %v448
      %v679 = vunpack.c.h.b16 %v448
      %v680 = vunpack.c.l.b16 %v449
      %v681 = vunpack.c.h.b16 %v449
      %v682 = vunpack.c.l.b16 %v450
      %v683 = vunpack.c.h.b16 %v450
      %v684 = vunpack.c.l.b16 %v451
      %v685 = vunpack.c.h.b16 %v451
      %v686 = vunpack.c.l.b16 %v452
      %v687 = vunpack.c.h.b16 %v452
      %v688 = vunpack.c.l.b16 %v453
      %v689 = vunpack.c.h.b16 %v453
      %v690 = vunpack.c.l.b16 %v454
      %v691 = vunpack.c.h.b16 %v454
      %v692 = vunpack.c.l.b16 %v455
      %v693 = vunpack.c.h.b16 %v455
      %v694 = vunpack.c.l.b16 %v456
      %v695 = vunpack.c.h.b16 %v456
      %v696 = vunpack.c.l.b16 %v457
      %v697 = vunpack.c.h.b16 %v457
      %v698 = vunpack.c.l.b16 %v458
      %v699 = vunpack.c.h.b16 %v458
      %v700 = vunpack.c.l.b16 %v459
      %v701 = vunpack.c.h.b16 %v459
      %v702 = vunpack.c.l.b16 %v460
      %v703 = vunpack.c.h.b16 %v460
      %v704 = vunpack.c.l.b16 %v461
      %v705 = vunpack.c.h.b16 %v461
      %v706 = vunpack.c.l.b16 %v462
      %v707 = vunpack.c.h.b16 %v462
      %v708 = vunpack.c.l.b16 %v463
      %v709 = vunpack.c.h.b16 %v463
      %v710 = vunpack.c.l.b16 %v464
      %v711 = vunpack.c.h.b16 %v464
      %v712 = vunpack.c.l.b16 %v465
      %v713 = vunpack.c.h.b16 %v465
      %v714 = vunpack.c.l.b16 %v466
      %v715 = vunpack.c.h.b16 %v466
      %v716 = vunpack.c.l.b16 %v467
      %v717 = vunpack.c.h.b16 %v467
      %v718 = vunpack.c.l.b16 %v468
      %v719 = vunpack.c.h.b16 %v468
      %v720 = vunpack.c.l.b16 %v469
      %v721 = vunpack.c.h.b16 %v469
      %v722 = vunpack.c.l.b16 %v470
      %v723 = vunpack.c.h.b16 %v470
      %v724 = vunpack.c.l.b16 %v471
      %v725 = vunpack.c.h.b16 %v471
      %v726 = vunpack.c.l.b16 %v472
      %v727 = vunpack.c.h.b16 %v472
      %v728 = vunpack.c.l.b16 %v473
      %v729 = vunpack.c.h.b16 %v473
      %v730 = vunpack.c.l.b16 %v474
      %v731 = vunpack.c.h.b16 %v474
      %v732 = vunpack.c.l.b16 %v475
      %v733 = vunpack.c.h.b16 %v475
      %v734 = vunpack.c.l.b16 %v476
      %v735 = vunpack.c.h.b16 %v476
      %v736 = vunpack.c.l.b16 %v477
      %v737 = vunpack.c.h.b16 %v477
      %v738 = vunpack.c.l.b16 %v478
      %v739 = vunpack.c.h.b16 %v478
      %v740 = vunpack.c.l.b16 %v479
      %v741 = vunpack.c.h.b16 %v479
      %v742 = vunpack.c.l.b16 %v480
      %v743 = vunpack.c.h.b16 %v480
      %v744 = vunpack.c.l.b16 %v481
      %v745 = vunpack.c.h.b16 %v481
      %v746 = vunpack.c.l.b16 %v482
      %v747 = vunpack.c.h.b16 %v482
      %v748 = vunpack.c.l.b16 %v483
      %v749 = vunpack.c.h.b16 %v483
      %v750 = vunpack.c.l.b16 %v484
      %v751 = vunpack.c.h.b16 %v484
      %v752 = vunpack.c.l.b16 %v485
      %v753 = vunpack.c.h.b16 %v485
      %v754 = vunpack.c.l.b16 %v486
      %v755 = vunpack.c.h.b16 %v486
      %v756 = vunpack.c.l.b16 %v487
      %v757 = vunpack.c.h.b16 %v487
      %v758 = vunpack.c.l.b16 %v488
      %v759 = vunpack.c.h.b16 %v488
      %v760 = vunpack.c.l.b16 %v489
      %v761 = vunpack.c.h.b16 %v489
      %v762 = vunpack.c.l.b16 %v490
      %v763 = vunpack.c.h.b16 %v490
      %v764 = vunpack.c.l.b16 %v491
      %v765 = vunpack.c.h.b16 %v491
      %v766 = vunpack.c.l.b16 %v492
      %v767 = vunpack.c.h.b16 %v492
      %v768 = vunpack.c.l.b16 %v493
      %v769 = vunpack.c.h.b16 %v493
      %v770 = vunpack.c.l.b16 %v494
      %v771 = vunpack.c.h.b16 %v494
      %v772 = vunpack.c.l.b16 %v495
      %v773 = vunpack.c.h.b16 %v495
      %v774 = vunpack.c.l.b16 %v496
      %v775 = vunpack.c.h.b16 %v496
      %v776 = vunpack.c.l.b16 %v497
      %v777 = vunpack.c.h.b16 %v497
      %v778 = vunpack.c.l.b16 %v498
      %v779 = vunpack.c.h.b16 %v498
      %v780 = vunpack.c.l.b16 %v499
      %v781 = vunpack.c.h.b16 %v499
      %v782 = vunpack.c.l.b16 %v500
      %v783 = vunpack.c.h.b16 %v500
      %v784 = vunpack.c.l.b16 %v501
      %v785 = vunpack.c.h.b16 %v501
      %v786 = vunpack.c.l.b16 %v502
      %v787 = vunpack.c.h.b16 %v502
      %v788 = vunpack.c.l.b16 %v503
      %v789 = vunpack.c.h.b16 %v503
      %v790 = vunpack.c.l.b16 %v504
      %v791 = vunpack.c.h.b16 %v504
      %v792 = vunpack.c.l.b16 %v505
      %v793 = vunpack.c.h.b16 %v505
      %v794 = vpack.c.b16 %v604, %v602
      %v795 = vpack.c.b16 %v605, %v603
      %v796 = vpack.c.b16 %v608, %v606
      %v797 = vpack.c.b16 %v609, %v607
      %v798 = vpack.c.b16 %v612, %v610
      %v799 = vpack.c.b16 %v613, %v611
      %v800 = vpack.c.b16 %v616, %v614
      %v801 = vpack.c.b16 %v617, %v615
      %v802 = vpack.c.b16 %v620, %v618
      %v803 = vpack.c.b16 %v621, %v619
      %v804 = vpack.c.b16 %v624, %v622
      %v805 = vpack.c.b16 %v625, %v623
      %v806 = vpack.c.b16 %v628, %v626
      %v807 = vpack.c.b16 %v629, %v627
      %v808 = vpack.c.b16 %v632, %v630
      %v809 = vpack.c.b16 %v633, %v631
      %v810 = vpack.c.b16 %v636, %v634
      %v811 = vpack.c.b16 %v637, %v635
      %v812 = vpack.c.b16 %v640, %v638
      %v813 = vpack.c.b16 %v641, %v639
      %v814 = vpack.c.b16 %v644, %v642
      %v815 = vpack.c.b16 %v645, %v643
      %v816 = vpack.c.b16 %v648, %v646
      %v817 = vpack.c.b16 %v649, %v647
      %v818 = vpack.c.b16 %v652, %v650
      %v819 = vpack.c.b16 %v653, %v651
      %v820 = vpack.c.b16 %v656, %v654
      %v821 = vpack.c.b16 %v657, %v655
      %v822 = vpack.c.b16 %v660, %v658
      %v823 = vpack.c.b16 %v661, %v659
      %v824 = vpack.c.b16 %v664, %v662
      %v825 = vpack.c.b16 %v665, %v663
      %v826 = vpack.c.b16 %v668, %v666
      %v827 = vpack.c.b16 %v669, %v667
      %v828 = vpack.c.b16 %v672, %v670
      %v829 = vpack.c.b16 %v673, %v671
      %v830 = vpack.c.b16 %v676, %v674
      %v831 = vpack.c.b16 %v677, %v675
      %v832 = vpack.c.b16 %v680, %v678
      %v833 = vpack.c.b16 %v681, %v679
      %v834 = vpack.c.b16 %v684, %v682
      %v835 = vpack.c.b16 %v685, %v683
      %v836 = vpack.c.b16 %v688, %v686
      %v837 = vpack.c.b16 %v689, %v687
      %v838 = vpack.c.b16 %v692, %v690
      %v839 = vpack.c.b16 %v693, %v691
      %v840 = vpack.c.b16 %v696, %v694
      %v841 = vpack.c.b16 %v697, %v695
      %v842 = vpack.c.b16 %v700, %v698
      %v843 = vpack.c.b16 %v701, %v699
      %v844 = vpack.c.b16 %v704, %v702
      %v845 = vpack.c.b16 %v705, %v703
      %v846 = vpack.c.b16 %v708, %v706
      %v847 = vpack.c.b16 %v709, %v707
      %v848 = vpack.c.b16 %v712, %v710
      %v849 = vpack.c.b16 %v713, %v711
      %v850 = vpack.c.b16 %v716, %v714
      %v851 = vpack.c.b16 %v717, %v715
      %v852 = vpack.c.b16 %v720, %v718
      %v853 = vpack.c.b16 %v721, %v719
      %v854 = vpack.c.b16 %v724, %v722
      %v855 = vpack.c.b16 %v725, %v723
      %v856 = vpack.c.b16 %v728, %v726
      %v857 = vpack.c.b16 %v729, %v727
      %v858 = vpack.c.b16 %v732, %v730
      %v859 = vpack.c.b16 %v733, %v731
      %v860 = vpack.c.b16 %v736, %v734
      %v861 = vpack.c.b16 %v737, %v735
      %v862 = vpack.c.b16 %v740, %v738
      %v863 = vpack.c.b16 %v741, %v739
      %v864 = vpack.c.b16 %v744, %v742
      %v865 = vpack.c.b16 %v745, %v743
      %v866 = vpack.c.b16 %v748, %v746
      %v867 = vpack.c.b16 %v749, %v747
      %v868 = vpack.c.b16 %v752, %v750
      %v869 = vpack.c.b16 %v753, %v751
      %v870 = vpack.c.b16 %v756, %v754
      %v871 = vpack.c.b16 %v757, %v755
      %v872 = vpack.c.b16 %v760, %v758
      %v873 = vpack.c.b16 %v761, %v759
      %v874 = vpack.c.b16 %v764, %v762
      %v875 = vpack.c.b16 %v765, %v763
      %v876 = vpack.c.b16 %v768, %v766
      %v877 = vpack.c.b16 %v769, %v767
      %v878 = vpack.c.b16 %v772, %v770
      %v879 = vpack.c.b16 %v773, %v771
      %v880 = vpack.c.b16 %v776, %v774
      %v881 = vpack.c.b16 %v777, %v775
      %v882 = vpack.c.b16 %v780, %v778
      %v883 = vpack.c.b16 %v781, %v779
      %v884 = vpack.c.b16 %v784, %v782
      %v885 = vpack.c.b16 %v785, %v783
      %v886 = vpack.c.b16 %v788, %v786
      %v887 = vpack.c.b16 %v789, %v787
      %v888 = vpack.c.b16 %v792, %v790
      %v889 = vpack.c.b16 %v793, %v791
      %986 = vmatprep.subr.bf16.mxu0 %v795
      %987 = vmatpush1.bf16.msra.mxu0 %v794
      %988 = vmatprep.subr.bf16.mxu0 %v797
      %989 = vmatpush1.bf16.msra.mxu0 %v796
      %990 = vmatprep.subr.bf16.mxu0 %v799
      %991 = vmatpush1.bf16.msra.mxu0 %v798
      %992 = vmatprep.subr.bf16.mxu0 %v801
      %993 = vmatpush1.bf16.msra.mxu0 %v800
      %994 = vmatprep.subr.bf16.mxu0 %v803
      %995 = vmatpush1.bf16.msra.mxu0 %v802
      %996 = vmatprep.subr.bf16.mxu0 %v805
      %997 = vmatpush1.bf16.msra.mxu0 %v804
      %998 = vmatprep.subr.bf16.mxu0 %v807
      %999 = vmatpush1.bf16.msra.mxu0 %v806
      %1000 = vmatprep.subr.bf16.mxu0 %v809
      %1001 = vmatpush1.bf16.msra.mxu0 %v808
      %1002 = vmatprep.subr.bf16.mxu0 %v811
      %1003 = vmatpush1.bf16.msra.mxu0 %v810
      %1004 = vmatprep.subr.bf16.mxu0 %v813
      %1005 = vmatpush1.bf16.msra.mxu0 %v812
      %1006 = vmatprep.subr.bf16.mxu0 %v815
      %1007 = vmatpush1.bf16.msra.mxu0 %v814
      %1008 = vmatprep.subr.bf16.mxu0 %v817
      %1009 = vmatpush1.bf16.msra.mxu0 %v816
      %1010 = vmatprep.subr.bf16.mxu0 %v819
      %1011 = vmatpush1.bf16.msra.mxu0 %v818
      %1012 = vmatprep.subr.bf16.mxu0 %v821
      %1013 = vmatpush1.bf16.msra.mxu0 %v820
      %1014 = vmatprep.subr.bf16.mxu0 %v823
      %1015 = vmatpush1.bf16.msra.mxu0 %v822
      %1016 = vmatprep.subr.bf16.mxu0 %v825
      %1017 = vmatpush1.bf16.msra.mxu0 %v824
      %1018 = vmatprep.mubr.bf16.mxu0 %v339
      %1019 = vmatmul.mubr.bf16.gmra.mrb[0].mxu0 %v338
      %v1020 = vpop.f32.mrb[0].mxu0
      %v1021 = vadd.f32 0.0, %v1020
      %v1022 = vpop.f32.mrb[0].mxu0
      %v1023 = vadd.f32 0.0, %v1022
      %v1024 = vpop.f32.mrb[0].mxu0
      %v1025 = vadd.f32 0.0, %v1024
      %v1026 = vpop.f32.mrb[0].mxu0
      %v1027 = vadd.f32 0.0, %v1026
      %1028 = vmatprep.mubr.bf16.mxu0 %v345
      %1029 = vmatmul.mubr.bf16.gmra.mrb[0].mxu0 %v344
      %v1030 = vpop.f32.mrb[0].mxu0
      %v1031 = vadd.f32 0.0, %v1030
      %v1032 = vpop.f32.mrb[0].mxu0
      %v1033 = vadd.f32 0.0, %v1032
      %v1034 = vpop.f32.mrb[0].mxu0
      %v1035 = vadd.f32 0.0, %v1034
      %v1036 = vpop.f32.mrb[0].mxu0
      %v1037 = vadd.f32 0.0, %v1036
      %1038 = vmatprep.mubr.bf16.mxu0 %v351
      %1039 = vmatmul.mubr.bf16.gmra.mrb[0].mxu0 %v350
      %v1040 = vpop.f32.mrb[0].mxu0
      %v1041 = vadd.f32 0.0, %v1040
      %v1042 = vpop.f32.mrb[0].mxu0
      %v1043 = vadd.f32 0.0, %v1042
      %v1044 = vpop.f32.mrb[0].mxu0
      %v1045 = vadd.f32 0.0, %v1044
      %v1046 = vpop.f32.mrb[0].mxu0
      %v1047 = vadd.f32 0.0, %v1046
      %1048 = vmatprep.mubr.bf16.mxu0 %v357
      %1049 = vmatmul.mubr.bf16.gmra.mrb[0].mxu0 %v356
      %v1050 = vpop.f32.mrb[0].mxu0
      %v1051 = vadd.f32 0.0, %v1050
      %v1052 = vpop.f32.mrb[0].mxu0
      %v1053 = vadd.f32 0.0, %v1052
      %v1054 = vpop.f32.mrb[0].mxu0
      %v1055 = vadd.f32 0.0, %v1054
      %v1056 = vpop.f32.mrb[0].mxu0
      %v1057 = vadd.f32 0.0, %v1056
      %1058 = vmatprep.mubr.bf16.mxu0 %v363
      %1059 = vmatmul.mubr.bf16.gmra.mrb[0].mxu0 %v362
      %v1060 = vpop.f32.mrb[0].mxu0
      %v1061 = vadd.f32 0.0, %v1060
      %v1062 = vpop.f32.mrb[0].mxu0
      %v1063 = vadd.f32 0.0, %v1062
      %v1064 = vpop.f32.mrb[0].mxu0
      %v1065 = vadd.f32 0.0, %v1064
      %v1066 = vpop.f32.mrb[0].mxu0
      %v1067 = vadd.f32 0.0, %v1066
      %1068 = vmatprep.mubr.bf16.mxu0 %v369
      %1069 = vmatmul.mubr.bf16.gmra.mrb[0].mxu0 %v368
      %v1070 = vpop.f32.mrb[0].mxu0
      %v1071 = vadd.f32 0.0, %v1070
      %v1072 = vpop.f32.mrb[0].mxu0
      %v1073 = vadd.f32 0.0, %v1072
      %v1074 = vpop.f32.mrb[0].mxu0
      %v1075 = vadd.f32 0.0, %v1074
      %v1076 = vpop.f32.mrb[0].mxu0
      %v1077 = vadd.f32 0.0, %v1076
      %1078 = vmatprep.mubr.bf16.mxu0 %v375
      %1079 = vmatmul.mubr.bf16.gmra.mrb[0].mxu0 %v374
      %v1080 = vpop.f32.mrb[0].mxu0
      %v1081 = vadd.f32 0.0, %v1080
      %v1082 = vpop.f32.mrb[0].mxu0
      %v1083 = vadd.f32 0.0, %v1082
      %v1084 = vpop.f32.mrb[0].mxu0
      %v1085 = vadd.f32 0.0, %v1084
      %v1086 = vpop.f32.mrb[0].mxu0
      %v1087 = vadd.f32 0.0, %v1086
      %1088 = vmatprep.mubr.bf16.mxu0 %v381
      %1089 = vmatmul.mubr.bf16.gmra.mrb[0].mxu0 %v380
      %v1090 = vpop.f32.mrb[0].mxu0
      %v1091 = vadd.f32 0.0, %v1090
      %v1092 = vpop.f32.mrb[0].mxu0
      %v1093 = vadd.f32 0.0, %v1092
      %v1094 = vpop.f32.mrb[0].mxu0
      %v1095 = vadd.f32 0.0, %v1094
      %v1096 = vpop.f32.mrb[0].mxu0
      %v1097 = vadd.f32 0.0, %v1096
      %1098 = vmatprep.mubr.bf16.mxu0 %v387
      %1099 = vmatmul.mubr.bf16.gmra.mrb[0].mxu0 %v386
      %v1100 = vpop.f32.mrb[0].mxu0
      %v1101 = vadd.f32 0.0, %v1100
      %v1102 = vpop.f32.mrb[0].mxu0
      %v1103 = vadd.f32 0.0, %v1102
      %v1104 = vpop.f32.mrb[0].mxu0
      %v1105 = vadd.f32 0.0, %v1104
      %v1106 = vpop.f32.mrb[0].mxu0
      %v1107 = vadd.f32 0.0, %v1106
      %1108 = vmatprep.mubr.bf16.mxu0 %v393
      %1109 = vmatmul.mubr.bf16.gmra.mrb[0].mxu0 %v392
      %v1110 = vpop.f32.mrb[0].mxu0
      %v1111 = vadd.f32 0.0, %v1110
      %v1112 = vpop.f32.mrb[0].mxu0
      %v1113 = vadd.f32 0.0, %v1112
      %v1114 = vpop.f32.mrb[0].mxu0
      %v1115 = vadd.f32 0.0, %v1114
      %v1116 = vpop.f32.mrb[0].mxu0
      %v1117 = vadd.f32 0.0, %v1116
      %1118 = vmatprep.mubr.bf16.mxu0 %v399
      %1119 = vmatmul.mubr.bf16.gmra.mrb[0].mxu0 %v398
      %v1120 = vpop.f32.mrb[0].mxu0
      %v1121 = vadd.f32 0.0, %v1120
      %v1122 = vpop.f32.mrb[0].mxu0
      %v1123 = vadd.f32 0.0, %v1122
      %v1124 = vpop.f32.mrb[0].mxu0
      %v1125 = vadd.f32 0.0, %v1124
      %v1126 = vpop.f32.mrb[0].mxu0
      %v1127 = vadd.f32 0.0, %v1126
      %1128 = vmatprep.mubr.bf16.mxu0 %v405
      %1129 = vmatmul.mubr.bf16.gmra.mrb[0].mxu0 %v404
      %v1130 = vpop.f32.mrb[0].mxu0
      %v1131 = vadd.f32 0.0, %v1130
      %v1132 = vpop.f32.mrb[0].mxu0
      %v1133 = vadd.f32 0.0, %v1132
      %v1134 = vpop.f32.mrb[0].mxu0
      %v1135 = vadd.f32 0.0, %v1134
      %v1136 = vpop.f32.mrb[0].mxu0
      %v1137 = vadd.f32 0.0, %v1136
      %1138 = vdwg.mxu0
      %1139 = vmatprep.subr.bf16.mxu0 %v827
      %1140 = vmatpush1.bf16.msra.mxu0 %v826
      %1141 = vmatprep.subr.bf16.mxu0 %v829
      %1142 = vmatpush1.bf16.msra.mxu0 %v828
      %1143 = vmatprep.subr.bf16.mxu0 %v831
      %1144 = vmatpush1.bf16.msra.mxu0 %v830
      %1145 = vmatprep.subr.bf16.mxu0 %v833
      %1146 = vmatpush1.bf16.msra.mxu0 %v832
      %1147 = vmatprep.subr.bf16.mxu0 %v835
      %1148 = vmatpush1.bf16.msra.mxu0 %v834
      %1149 = vmatprep.subr.bf16.mxu0 %v837
      %1150 = vmatpush1.bf16.msra.mxu0 %v836
      %1151 = vmatprep.subr.bf16.mxu0 %v839
      %1152 = vmatpush1.bf16.msra.mxu0 %v838
      %1153 = vmatprep.subr.bf16.mxu0 %v841
      %1154 = vmatpush1.bf16.msra.mxu0 %v840
      %1155 = vmatprep.subr.bf16.mxu0 %v843
      %1156 = vmatpush1.bf16.msra.mxu0 %v842
      %1157 = vmatprep.subr.bf16.mxu0 %v845
      %1158 = vmatpush1.bf16.msra.mxu0 %v844
      %1159 = vmatprep.subr.bf16.mxu0 %v847
      %1160 = vmatpush1.bf16.msra.mxu0 %v846
      %1161 = vmatprep.subr.bf16.mxu0 %v849
      %1162 = vmatpush1.bf16.msra.mxu0 %v848
      %1163 = vmatprep.subr.bf16.mxu0 %v851
      %1164 = vmatpush1.bf16.msra.mxu0 %v850
      %1165 = vmatprep.subr.bf16.mxu0 %v853
      %1166 = vmatpush1.bf16.msra.mxu0 %v852
      %1167 = vmatprep.subr.bf16.mxu0 %v855
      %1168 = vmatpush1.bf16.msra.mxu0 %v854
      %1169 = vmatprep.subr.bf16.mxu0 %v857
      %1170 = vmatpush1.bf16.msra.mxu0 %v856
      %1171 = vmatprep.mubr.bf16.mxu0 %v341
      %1172 = vmatmul.mubr.bf16.gmra.mrb[0].mxu0 %v340
      %v1173 = vpop.f32.mrb[0].mxu0
      %v1174 = vadd.f32 %v1021, %v1173
      %v1175 = vpop.f32.mrb[0].mxu0
      %v1176 = vadd.f32 %v1023, %v1175
      %v1177 = vpop.f32.mrb[0].mxu0
      %v1178 = vadd.f32 %v1025, %v1177
      %v1179 = vpop.f32.mrb[0].mxu0
      %v1180 = vadd.f32 %v1027, %v1179
      %1181 = vmatprep.mubr.bf16.mxu0 %v347
      %1182 = vmatmul.mubr.bf16.gmra.mrb[0].mxu0 %v346
      %v1183 = vpop.f32.mrb[0].mxu0
      %v1184 = vadd.f32 %v1031, %v1183
      %v1185 = vpop.f32.mrb[0].mxu0
      %v1186 = vadd.f32 %v1033, %v1185
      %v1187 = vpop.f32.mrb[0].mxu0
      %v1188 = vadd.f32 %v1035, %v1187
      %v1189 = vpop.f32.mrb[0].mxu0
      %v1190 = vadd.f32 %v1037, %v1189
      %1191 = vmatprep.mubr.bf16.mxu0 %v353
      %1192 = vmatmul.mubr.bf16.gmra.mrb[0].mxu0 %v352
      %v1193 = vpop.f32.mrb[0].mxu0
      %v1194 = vadd.f32 %v1041, %v1193
      %v1195 = vpop.f32.mrb[0].mxu0
      %v1196 = vadd.f32 %v1043, %v1195
      %v1197 = vpop.f32.mrb[0].mxu0
      %v1198 = vadd.f32 %v1045, %v1197
      %v1199 = vpop.f32.mrb[0].mxu0
      %v1200 = vadd.f32 %v1047, %v1199
      %1201 = vmatprep.mubr.bf16.mxu0 %v359
      %1202 = vmatmul.mubr.bf16.gmra.mrb[0].mxu0 %v358
      %v1203 = vpop.f32.mrb[0].mxu0
      %v1204 = vadd.f32 %v1051, %v1203
      %v1205 = vpop.f32.mrb[0].mxu0
      %v1206 = vadd.f32 %v1053, %v1205
      %v1207 = vpop.f32.mrb[0].mxu0
      %v1208 = vadd.f32 %v1055, %v1207
      %v1209 = vpop.f32.mrb[0].mxu0
      %v1210 = vadd.f32 %v1057, %v1209
      %1211 = vmatprep.mubr.bf16.mxu0 %v365
      %1212 = vmatmul.mubr.bf16.gmra.mrb[0].mxu0 %v364
      %v1213 = vpop.f32.mrb[0].mxu0
      %v1214 = vadd.f32 %v1061, %v1213
      %v1215 = vpop.f32.mrb[0].mxu0
      %v1216 = vadd.f32 %v1063, %v1215
      %v1217 = vpop.f32.mrb[0].mxu0
      %v1218 = vadd.f32 %v1065, %v1217
      %v1219 = vpop.f32.mrb[0].mxu0
      %v1220 = vadd.f32 %v1067, %v1219
      %1221 = vmatprep.mubr.bf16.mxu0 %v371
      %1222 = vmatmul.mubr.bf16.gmra.mrb[0].mxu0 %v370
      %v1223 = vpop.f32.mrb[0].mxu0
      %v1224 = vadd.f32 %v1071, %v1223
      %v1225 = vpop.f32.mrb[0].mxu0
      %v1226 = vadd.f32 %v1073, %v1225
      %v1227 = vpop.f32.mrb[0].mxu0
      %v1228 = vadd.f32 %v1075, %v1227
      %v1229 = vpop.f32.mrb[0].mxu0
      %v1230 = vadd.f32 %v1077, %v1229
      %1231 = vmatprep.mubr.bf16.mxu0 %v377
      %1232 = vmatmul.mubr.bf16.gmra.mrb[0].mxu0 %v376
      %v1233 = vpop.f32.mrb[0].mxu0
      %v1234 = vadd.f32 %v1081, %v1233
      %v1235 = vpop.f32.mrb[0].mxu0
      %v1236 = vadd.f32 %v1083, %v1235
      %v1237 = vpop.f32.mrb[0].mxu0
      %v1238 = vadd.f32 %v1085, %v1237
      %v1239 = vpop.f32.mrb[0].mxu0
      %v1240 = vadd.f32 %v1087, %v1239
      %1241 = vmatprep.mubr.bf16.mxu0 %v383
      %1242 = vmatmul.mubr.bf16.gmra.mrb[0].mxu0 %v382
      %v1243 = vpop.f32.mrb[0].mxu0
      %v1244 = vadd.f32 %v1091, %v1243
      %v1245 = vpop.f32.mrb[0].mxu0
      %v1246 = vadd.f32 %v1093, %v1245
      %v1247 = vpop.f32.mrb[0].mxu0
      %v1248 = vadd.f32 %v1095, %v1247
      %v1249 = vpop.f32.mrb[0].mxu0
      %v1250 = vadd.f32 %v1097, %v1249
      %1251 = vmatprep.mubr.bf16.mxu0 %v389
      %1252 = vmatmul.mubr.bf16.gmra.mrb[0].mxu0 %v388
      %v1253 = vpop.f32.mrb[0].mxu0
      %v1254 = vadd.f32 %v1101, %v1253
      %v1255 = vpop.f32.mrb[0].mxu0
      %v1256 = vadd.f32 %v1103, %v1255
      %v1257 = vpop.f32.mrb[0].mxu0
      %v1258 = vadd.f32 %v1105, %v1257
      %v1259 = vpop.f32.mrb[0].mxu0
      %v1260 = vadd.f32 %v1107, %v1259
      %1261 = vmatprep.mubr.bf16.mxu0 %v395
      %1262 = vmatmul.mubr.bf16.gmra.mrb[0].mxu0 %v394
      %v1263 = vpop.f32.mrb[0].mxu0
      %v1264 = vadd.f32 %v1111, %v1263
      %v1265 = vpop.f32.mrb[0].mxu0
      %v1266 = vadd.f32 %v1113, %v1265
      %v1267 = vpop.f32.mrb[0].mxu0
      %v1268 = vadd.f32 %v1115, %v1267
      %v1269 = vpop.f32.mrb[0].mxu0
      %v1270 = vadd.f32 %v1117, %v1269
      %1271 = vmatprep.mubr.bf16.mxu0 %v401
      %1272 = vmatmul.mubr.bf16.gmra.mrb[0].mxu0 %v400
      %v1273 = vpop.f32.mrb[0].mxu0
      %v1274 = vadd.f32 %v1121, %v1273
      %v1275 = vpop.f32.mrb[0].mxu0
      %v1276 = vadd.f32 %v1123, %v1275
      %v1277 = vpop.f32.mrb[0].mxu0
      %v1278 = vadd.f32 %v1125, %v1277
      %v1279 = vpop.f32.mrb[0].mxu0
      %v1280 = vadd.f32 %v1127, %v1279
      %1281 = vmatprep.mubr.bf16.mxu0 %v407
      %1282 = vmatmul.mubr.bf16.gmra.mrb[0].mxu0 %v406
      %v1283 = vpop.f32.mrb[0].mxu0
      %v1284 = vadd.f32 %v1131, %v1283
      %v1285 = vpop.f32.mrb[0].mxu0
      %v1286 = vadd.f32 %v1133, %v1285
      %v1287 = vpop.f32.mrb[0].mxu0
      %v1288 = vadd.f32 %v1135, %v1287
      %v1289 = vpop.f32.mrb[0].mxu0
      %v1290 = vadd.f32 %v1137, %v1289
      %1291 = vdwg.mxu0
      %1292 = vmatprep.subr.bf16.mxu0 %v859
      %1293 = vmatpush1.bf16.msra.mxu0 %v858
      %1294 = vmatprep.subr.bf16.mxu0 %v861
      %1295 = vmatpush1.bf16.msra.mxu0 %v860
      %1296 = vmatprep.subr.bf16.mxu0 %v863
      %1297 = vmatpush1.bf16.msra.mxu0 %v862
      %1298 = vmatprep.subr.bf16.mxu0 %v865
      %1299 = vmatpush1.bf16.msra.mxu0 %v864
      %1300 = vmatprep.subr.bf16.mxu0 %v867
      %1301 = vmatpush1.bf16.msra.mxu0 %v866
      %1302 = vmatprep.subr.bf16.mxu0 %v869
      %1303 = vmatpush1.bf16.msra.mxu0 %v868
      %1304 = vmatprep.subr.bf16.mxu0 %v871
      %1305 = vmatpush1.bf16.msra.mxu0 %v870
      %1306 = vmatprep.subr.bf16.mxu0 %v873
      %1307 = vmatpush1.bf16.msra.mxu0 %v872
      %1308 = vmatprep.subr.bf16.mxu0 %v875
      %1309 = vmatpush1.bf16.msra.mxu0 %v874
      %1310 = vmatprep.subr.bf16.mxu0 %v877
      %1311 = vmatpush1.bf16.msra.mxu0 %v876
      %1312 = vmatprep.subr.bf16.mxu0 %v879
      %1313 = vmatpush1.bf16.msra.mxu0 %v878
      %1314 = vmatprep.subr.bf16.mxu0 %v881
      %1315 = vmatpush1.bf16.msra.mxu0 %v880
      %1316 = vmatprep.subr.bf16.mxu0 %v883
      %1317 = vmatpush1.bf16.msra.mxu0 %v882
      %1318 = vmatprep.subr.bf16.mxu0 %v885
      %1319 = vmatpush1.bf16.msra.mxu0 %v884
      %1320 = vmatprep.subr.bf16.mxu0 %v887
      %1321 = vmatpush1.bf16.msra.mxu0 %v886
      %1322 = vmatprep.subr.bf16.mxu0 %v889
      %1323 = vmatpush1.bf16.msra.mxu0 %v888
      %1324 = vmatprep.mubr.bf16.mxu0 %v343
      %1325 = vmatmul.mubr.bf16.gmra.mrb[0].mxu0 %v342
      %v1326 = vpop.f32.mrb[0].mxu0
      %v1327 = vadd.f32 %v1174, %v1326
      %v1328 = vpop.f32.mrb[0].mxu0
      %v1329 = vadd.f32 %v1176, %v1328
      %v1330 = vpop.f32.mrb[0].mxu0
      %v1331 = vadd.f32 %v1178, %v1330
      %v1332 = vpop.f32.mrb[0].mxu0
      %v1333 = vadd.f32 %v1180, %v1332
      %1334 = vmatprep.mubr.bf16.mxu0 %v349
      %1335 = vmatmul.mubr.bf16.gmra.mrb[0].mxu0 %v348
      %v1336 = vpop.f32.mrb[0].mxu0
      %v1337 = vadd.f32 %v1184, %v1336
      %v1338 = vpop.f32.mrb[0].mxu0
      %v1339 = vadd.f32 %v1186, %v1338
      %v1340 = vpop.f32.mrb[0].mxu0
      %v1341 = vadd.f32 %v1188, %v1340
      %v1342 = vpop.f32.mrb[0].mxu0
      %v1343 = vadd.f32 %v1190, %v1342
      %1344 = vmatprep.mubr.bf16.mxu0 %v355
      %1345 = vmatmul.mubr.bf16.gmra.mrb[0].mxu0 %v354
      %v1346 = vpop.f32.mrb[0].mxu0
      %v1347 = vadd.f32 %v1194, %v1346
      %v1348 = vpop.f32.mrb[0].mxu0
      %v1349 = vadd.f32 %v1196, %v1348
      %v1350 = vpop.f32.mrb[0].mxu0
      %v1351 = vadd.f32 %v1198, %v1350
      %v1352 = vpop.f32.mrb[0].mxu0
      %v1353 = vadd.f32 %v1200, %v1352
      %1354 = vmatprep.mubr.bf16.mxu0 %v361
      %1355 = vmatmul.mubr.bf16.gmra.mrb[0].mxu0 %v360
      %v1356 = vpop.f32.mrb[0].mxu0
      %v1357 = vadd.f32 %v1204, %v1356
      %v1358 = vpop.f32.mrb[0].mxu0
      %v1359 = vadd.f32 %v1206, %v1358
      %v1360 = vpop.f32.mrb[0].mxu0
      %v1361 = vadd.f32 %v1208, %v1360
      %v1362 = vpop.f32.mrb[0].mxu0
      %v1363 = vadd.f32 %v1210, %v1362
      %1364 = vmatprep.mubr.bf16.mxu0 %v367
      %1365 = vmatmul.mubr.bf16.gmra.mrb[0].mxu0 %v366
      %v1366 = vpop.f32.mrb[0].mxu0
      %v1367 = vadd.f32 %v1214, %v1366
      %v1368 = vpop.f32.mrb[0].mxu0
      %v1369 = vadd.f32 %v1216, %v1368
      %v1370 = vpop.f32.mrb[0].mxu0
      %v1371 = vadd.f32 %v1218, %v1370
      %v1372 = vpop.f32.mrb[0].mxu0
      %v1373 = vadd.f32 %v1220, %v1372
      %1374 = vmatprep.mubr.bf16.mxu0 %v373
      %1375 = vmatmul.mubr.bf16.gmra.mrb[0].mxu0 %v372
      %v1376 = vpop.f32.mrb[0].mxu0
      %v1377 = vadd.f32 %v1224, %v1376
      %v1378 = vpop.f32.mrb[0].mxu0
      %v1379 = vadd.f32 %v1226, %v1378
      %v1380 = vpop.f32.mrb[0].mxu0
      %v1381 = vadd.f32 %v1228, %v1380
      %v1382 = vpop.f32.mrb[0].mxu0
      %v1383 = vadd.f32 %v1230, %v1382
      %1384 = vmatprep.mubr.bf16.mxu0 %v379
      %1385 = vmatmul.mubr.bf16.gmra.mrb[0].mxu0 %v378
      %v1386 = vpop.f32.mrb[0].mxu0
      %v1387 = vadd.f32 %v1234, %v1386
      %v1388 = vpop.f32.mrb[0].mxu0
      %v1389 = vadd.f32 %v1236, %v1388
      %v1390 = vpop.f32.mrb[0].mxu0
      %v1391 = vadd.f32 %v1238, %v1390
      %v1392 = vpop.f32.mrb[0].mxu0
      %v1393 = vadd.f32 %v1240, %v1392
      %1394 = vmatprep.mubr.bf16.mxu0 %v385
      %1395 = vmatmul.mubr.bf16.gmra.mrb[0].mxu0 %v384
      %v1396 = vpop.f32.mrb[0].mxu0
      %v1397 = vadd.f32 %v1244, %v1396
      %v1398 = vpop.f32.mrb[0].mxu0
      %v1399 = vadd.f32 %v1246, %v1398
      %v1400 = vpop.f32.mrb[0].mxu0
      %v1401 = vadd.f32 %v1248, %v1400
      %v1402 = vpop.f32.mrb[0].mxu0
      %v1403 = vadd.f32 %v1250, %v1402
      %1404 = vmatprep.mubr.bf16.mxu0 %v391
      %1405 = vmatmul.mubr.bf16.gmra.mrb[0].mxu0 %v390
      %v1406 = vpop.f32.mrb[0].mxu0
      %v1407 = vadd.f32 %v1254, %v1406
      %v1408 = vpop.f32.mrb[0].mxu0
      %v1409 = vadd.f32 %v1256, %v1408
      %v1410 = vpop.f32.mrb[0].mxu0
      %v1411 = vadd.f32 %v1258, %v1410
      %v1412 = vpop.f32.mrb[0].mxu0
      %v1413 = vadd.f32 %v1260, %v1412
      %1414 = vmatprep.mubr.bf16.mxu0 %v397
      %1415 = vmatmul.mubr.bf16.gmra.mrb[0].mxu0 %v396
      %v1416 = vpop.f32.mrb[0].mxu0
      %v1417 = vadd.f32 %v1264, %v1416
      %v1418 = vpop.f32.mrb[0].mxu0
      %v1419 = vadd.f32 %v1266, %v1418
      %v1420 = vpop.f32.mrb[0].mxu0
      %v1421 = vadd.f32 %v1268, %v1420
      %v1422 = vpop.f32.mrb[0].mxu0
      %v1423 = vadd.f32 %v1270, %v1422
      %1424 = vmatprep.mubr.bf16.mxu0 %v403
      %1425 = vmatmul.mubr.bf16.gmra.mrb[0].mxu0 %v402
      %v1426 = vpop.f32.mrb[0].mxu0
      %v1427 = vadd.f32 %v1274, %v1426
      %v1428 = vpop.f32.mrb[0].mxu0
      %v1429 = vadd.f32 %v1276, %v1428
      %v1430 = vpop.f32.mrb[0].mxu0
      %v1431 = vadd.f32 %v1278, %v1430
      %v1432 = vpop.f32.mrb[0].mxu0
      %v1433 = vadd.f32 %v1280, %v1432
      %1434 = vmatprep.mubr.bf16.mxu0 %v409
      %1435 = vmatmul.mubr.bf16.gmra.mrb[0].mxu0 %v408
      %v1436 = vpop.f32.mrb[0].mxu0
      %v1437 = vadd.f32 %v1284, %v1436
      %v1438 = vpop.f32.mrb[0].mxu0
      %v1439 = vadd.f32 %v1286, %v1438
      %v1440 = vpop.f32.mrb[0].mxu0
      %v1441 = vadd.f32 %v1288, %v1440
      %v1442 = vpop.f32.mrb[0].mxu0
      %v1443 = vadd.f32 %v1290, %v1442
      %1444 = vdwg.mxu0
      %1445 = vst [vmem:[%s192] sm:$0xff] %v1327
      %vm1446 = vcmask 556032
      %1447 = vst.msk [vmem:[%s192 + $0x8] sm:$0xff] %vm1446, %v1329
      %1448 = vst [vmem:[%s192 + $0x10] sm:$0xff] %v1331
      %1449 = vst.msk [vmem:[%s192 + $0x18] sm:$0xff] %vm1446, %v1333
      %1450 = vst [vmem:[%s192 + $0x20] sm:$0xff] %v1337
      %1451 = vst.msk [vmem:[%s192 + $0x28] sm:$0xff] %vm1446, %v1339
      %1452 = vst [vmem:[%s192 + $0x30] sm:$0xff] %v1341
      %1453 = vst.msk [vmem:[%s192 + $0x38] sm:$0xff] %vm1446, %v1343
      %1454 = vst [vmem:[%s192 + $0x40] sm:$0xff] %v1347
      %1455 = vst.msk [vmem:[%s192 + $0x48] sm:$0xff] %vm1446, %v1349
      %1456 = vst [vmem:[%s192 + $0x50] sm:$0xff] %v1351
      %1457 = vst.msk [vmem:[%s192 + $0x58] sm:$0xff] %vm1446, %v1353
      %1458 = vst [vmem:[%s192 + $0x60] sm:$0xff] %v1357
      %1459 = vst.msk [vmem:[%s192 + $0x68] sm:$0xff] %vm1446, %v1359
      %1460 = vst [vmem:[%s192 + $0x70] sm:$0xff] %v1361
      %1461 = vst.msk [vmem:[%s192 + $0x78] sm:$0xff] %vm1446, %v1363
      %1462 = vst [vmem:[%s192 + $0x80] sm:$0xff] %v1367
      %1463 = vst.msk [vmem:[%s192 + $0x88] sm:$0xff] %vm1446, %v1369
      %1464 = vst [vmem:[%s192 + $0x90] sm:$0xff] %v1371
      %1465 = vst.msk [vmem:[%s192 + $0x98] sm:$0xff] %vm1446, %v1373
      %1466 = vst [vmem:[%s192 + $0xa0] sm:$0xff] %v1377
      %1467 = vst.msk [vmem:[%s192 + $0xa8] sm:$0xff] %vm1446, %v1379
      %1468 = vst [vmem:[%s192 + $0xb0] sm:$0xff] %v1381
      %1469 = vst.msk [vmem:[%s192 + $0xb8] sm:$0xff] %vm1446, %v1383
      %1470 = vst [vmem:[%s192 + $0xc0] sm:$0xff] %v1387
      %1471 = vst.msk [vmem:[%s192 + $0xc8] sm:$0xff] %vm1446, %v1389
      %1472 = vst [vmem:[%s192 + $0xd0] sm:$0xff] %v1391
      %1473 = vst.msk [vmem:[%s192 + $0xd8] sm:$0xff] %vm1446, %v1393
      %1474 = vst [vmem:[%s192 + $0xe0] sm:$0xff] %v1397
      %1475 = vst.msk [vmem:[%s192 + $0xe8] sm:$0xff] %vm1446, %v1399
      %1476 = vst [vmem:[%s192 + $0xf0] sm:$0xff] %v1401
      %1477 = vst.msk [vmem:[%s192 + $0xf8] sm:$0xff] %vm1446, %v1403
      %1478 = vst [vmem:[%s192 + $0x100] sm:$0xff] %v1407
      %1479 = vst.msk [vmem:[%s192 + $0x108] sm:$0xff] %vm1446, %v1409
      %1480 = vst [vmem:[%s192 + $0x110] sm:$0xff] %v1411
      %1481 = vst.msk [vmem:[%s192 + $0x118] sm:$0xff] %vm1446, %v1413
      %1482 = vst [vmem:[%s192 + $0x120] sm:$0xff] %v1417
      %1483 = vst.msk [vmem:[%s192 + $0x128] sm:$0xff] %vm1446, %v1419
      %1484 = vst [vmem:[%s192 + $0x130] sm:$0xff] %v1421
      %1485 = vst.msk [vmem:[%s192 + $0x138] sm:$0xff] %vm1446, %v1423
      %1486 = vst [vmem:[%s192 + $0x140] sm:$0xff] %v1427
      %1487 = vst.msk [vmem:[%s192 + $0x148] sm:$0xff] %vm1446, %v1429
      %1488 = vst [vmem:[%s192 + $0x150] sm:$0xff] %v1431
      %1489 = vst.msk [vmem:[%s192 + $0x158] sm:$0xff] %vm1446, %v1433
      %1490 = vst [vmem:[%s192 + $0x160] sm:$0xff] %v1437
      %1491 = vst.msk [vmem:[%s192 + $0x168] sm:$0xff] %vm1446, %v1439
      %1492 = vst [vmem:[%s192 + $0x170] sm:$0xff] %v1441
      %1493 = vst.msk [vmem:[%s192 + $0x178] sm:$0xff] %vm1446, %v1443
      %s1494 = smul.u32 24, %s18
      %p1495 = scmp.lt.s32.totalorder %s17, 0
      %s1496 = scalar_select %p1495, %s17, 0
      %p1497 = scmp.lt.s32.totalorder %s1494, 47
      %s1498 = scalar_select %p1497, %s1494, 47
      %s1499 = smul.addr %s1498, 2
      %s1500 = smul.addr %s1496, 96
      %s1501 = sadd.s32 %s1499, %s1500
      %s1502 = smul.addr %s1501, 8
      %s1503 = scalar_lea.vmem %s2, %s1502
      // Predicated region
      $region29: #{conv1x1_avgpool.1} parent=27 // pred_check
        %p1504 = pneg %p97
      $region30: #{conv1x1_avgpool.1} parent=27 // pred_check_branch
        %1506 = sbr.rel (%p1504) target = $region32
      $region31: #{conv1x1_avgpool.1} parent=27 // pred_region
        %s1507 = smul.u32 24, %s18
      $region32: #{conv1x1_avgpool.1} parent=27 // pred_fallthru
        _
    $region28: #{conv1x1_avgpool.1} parent=5 // pred_fallthru
      _
    %p1508 = scmp.le.s32.totalorder 2, %s8
    // Predicated region
    $region33: #{conv1x1_avgpool.1} parent=5 // pred_check
      %p1509 = pneg %p1508
    $region34: #{conv1x1_avgpool.1} parent=5 // pred_check_branch
      %1511 = sbr.rel (%p1509) target = $region36
    $region35: #{conv1x1_avgpool.1} parent=5 // pred_region
      %s1512 = ssub.s32 %s8, 2
      // Predicated region
      $region37: #{conv1x1_avgpool.1} parent=35 // pred_check
        %p1513 = pneg %p103
      $region38: #{conv1x1_avgpool.1} parent=35 // pred_check_branch
        %1515 = sbr.rel (%p1513) target = $region40
      $region39: #{conv1x1_avgpool.1} parent=35 // pred_region
        %s1516 = smul.u32 24, %s20
        %p1517 = scmp.lt.s32.totalorder %s19, 0
        %s1518 = scalar_select %p1517, %s19, 0
        %p1519 = scmp.lt.s32.totalorder %s1516, 47
        %s1520 = scalar_select %p1519, %s1516, 47
        %s1521 = smul.addr %s1520, 2
        %s1522 = smul.addr %s1518, 96
        %s1523 = sadd.s32 %s1521, %s1522
        %s1524 = smul.addr %s1523, 8
        %s1525 = scalar_lea.vmem %s2, %s1524
      $region40: #{conv1x1_avgpool.1} parent=35 // pred_fallthru
        _
    $region36: #{conv1x1_avgpool.1} parent=5 // pred_fallthru
      _
  $region6: #{conv1x1_avgpool.1} parent=0 // loop_footer
    %s12 = sadd.s32 1, %s8
  $region7: #{conv1x1_avgpool.1} parent=0 // loop_footer_branch
    %7 = sbr.rel target = $region3
  $region8: #{conv1x1_avgpool.1} parent=0 // loop_exit
    _

</llo_original>
